<compile_context>
chip_gen: v7x
topology: tpu7x:2x2x1
jax: 0.10.0
libtpu: 0.0.40
codegen_flags: <defaults>
</compile_context>

<pallas_src>
import functools

import jax
import jax.numpy as jnp
from jax import lax
from jax.experimental import pallas as pl
from jax.experimental.pallas import tpu as pltpu

_LANE = 128
_DEFAULT_TILE_CAP = 4096  # ~3 MiB of per-step VMEM at f32; far under scoped limits


def _round_up(x, m):
    return (x + m - 1) // m * m


def _num_tensorcores():
    """Best-effort TensorCore count of the attached chip (v7x packs 2/chip)."""
    try:
        kind = (getattr(jax.devices()[0], "device_kind", "") or "").lower()
        if "v7" in kind:
            return 2
    except Exception:
        pass
    return 1


def _choose_batch_tile(batch, cap=_DEFAULT_TILE_CAP):
    """Largest 128-aligned batch tile <= cap.

    v5e/v6e (single TC): never shrink the tile just to get more grid steps —
    per-step pipeline overhead dominates this tiny MLP, bigger tiles win.
    v7x (2 TCs): keep >=2 steps per core when the batch allows so the
    "parallel" grid axis actually shards across both cores.
    """
    b_al = _round_up(max(int(batch), 1), _LANE)
    tb = min(cap, b_al)
    n_tc = _num_tensorcores()
    if n_tc > 1:
        min_steps = 2 * n_tc
        while tb > _LANE and pl.cdiv(batch, tb) < min_steps:
            tb = max(_LANE, (tb // 2) // _LANE * _LANE)
    return tb


def _mlp_kernel(x_ref, w1_ref, b1_ref, w2_ref, b2_ref, w3_ref, b3_ref, o_ref):
    """Fused 3-layer MLP for one batch tile, computed feature-major.

    x_ref : [tb, in_dim]      batch-major obs tile (f32 in HBM)
    wN_ref: [fan_out, fan_in] PyTorch layout, cast to the compute dtype
    bN_ref: [fan_out, 1]      f32 (bias add + LeakyReLU stay f32)
    o_ref : [out_dim, tb]     lane-dense (batch on the lane axis)
    """
    cdt = w1_ref.dtype              # matmul-operand dtype (f32 or bf16)
    x = x_ref[...].astype(cdt)      # in-kernel cast: obs read from HBM as f32

    # layer1: h1 = w1 @ x^T -> [64, tb] via trans_b dot_general (no explicit
    # transpose of the obs tile is materialized); f32 accumulation.
    h1 = lax.dot_general(
        w1_ref[...], x,
        dimension_numbers=(((1,), (1,)), ((), ())),
        preferred_element_type=jnp.float32)
    h1 = h1 + b1_ref[...]
    h1 = jnp.where(h1 > 0, h1, 0.01 * h1)           # f32 LeakyReLU

    # layer2: [64, tb]
    h2 = jnp.dot(w2_ref[...], h1.astype(cdt), preferred_element_type=jnp.float32)
    h2 = h2 + b2_ref[...]
    h2 = jnp.where(h2 > 0, h2, 0.01 * h2)

    # layer3 (no activation): [out_dim, tb]
    out = jnp.dot(w3_ref[...], h2.astype(cdt), preferred_element_type=jnp.float32)
    o_ref[...] = (out + b3_ref[...]).astype(o_ref.dtype)


@functools.partial(jax.jit, static_argnames=("batch_tile", "compute_dtype"))
def feedforward_crit_2(obs, params, *, batch_tile=None, compute_dtype=jnp.float32):
    """Pallas forward pass of FeedForwardNN_crit_2.

    obs:    [B, in_dim] float32
    params: dict with w1 [64,in_dim], b1 [64,1], w2 [64,64], b2 [64,1],
            w3 [out_dim,64], b3 [out_dim,1]   (PyTorch [fan_out, fan_in] layout)
    compute_dtype: jnp.float32 (default) or jnp.bfloat16 matmul operands;
            accumulation, bias-add and LeakyReLU are always f32 and the
            returned output is f32.  (bf16 path is ~1e-2 accurate, not 1e-4.)
    Returns [B, out_dim] float32.
    """
    w1, b1 = params["w1"], params["b1"]
    w2, b2 = params["w2"], params["b2"]
    w3, b3 = params["w3"], params["b3"]

    obs = obs.astype(jnp.float32)
    B, in_dim = obs.shape
    hidden = w1.shape[0]
    out_dim = w3.shape[0]

    if batch_tile is None:
        tb = _choose_batch_tile(B)
    else:
        # Clamp explicit tiles so a small batch never DMAs a huge padded tile.
        tb = min(_round_up(int(batch_tile), _LANE), _round_up(B, _LANE))

    grid = (pl.cdiv(B, tb),)

    cdt = jnp.dtype(compute_dtype)
    # Only the tiny weights are cast in the wrapper; obs stays f32 in HBM and
    # is cast inside the kernel, biases stay f32 for the f32 bias-add.
    w1c, w2c, w3c = (w.astype(cdt) for w in (w1, w2, w3))
    b1f, b2f, b3f = (b.astype(jnp.float32) for b in (b1, b2, b3))

    # Advisory cost so XLA schedules this call sensibly inside a larger step.
    flops = 2 * B * (in_dim * hidden + hidden * hidden + hidden * out_dim)
    bytes_accessed = (B * in_dim * 4 + B * out_dim * 4
                      + (w1.size + w2.size + w3.size) * cdt.itemsize
                      + (b1.size + b2.size + b3.size) * 4)
    cost = pl.CostEstimate(flops=int(flops), transcendentals=0,
                           bytes_accessed=int(bytes_accessed))

    in_specs = [
        pl.BlockSpec((tb, in_dim), lambda i: (i, 0)),        # obs tile (batch-major)
        pl.BlockSpec((hidden, in_dim), lambda i: (0, 0)),    # w1  [64, in]
        pl.BlockSpec((hidden, 1), lambda i: (0, 0)),         # b1  [64, 1]
        pl.BlockSpec((hidden, hidden), lambda i: (0, 0)),    # w2  [64, 64]
        pl.BlockSpec((hidden, 1), lambda i: (0, 0)),         # b2  [64, 1]
        pl.BlockSpec((out_dim, hidden), lambda i: (0, 0)),   # w3  [out, 64]
        pl.BlockSpec((out_dim, 1), lambda i: (0, 0)),        # b3  [out, 1]
    ]
    # Lane-dense output slab: [out_dim, B], batch on the lane axis.  Ragged
    # tail blocks (B not a multiple of tb) are masked by Pallas on store.
    out_spec = pl.BlockSpec((out_dim, tb), lambda i: (0, i))

    out_t = pl.pallas_call(
        _mlp_kernel,
        out_shape=jax.ShapeDtypeStruct((out_dim, B), jnp.float32),
        grid=grid,
        in_specs=in_specs,
        out_specs=out_spec,
        compiler_params=pltpu.CompilerParams(
            dimension_semantics=("parallel",)),
        cost_estimate=cost,
    )(obs, w1c, b1f, w2c, b2f, w3c, b3f)

    # Module semantics want batch-major [B, out_dim]; the kernel keeps the
    # lane-dense [out_dim, B] layout, so this is a single small transpose.
    # Consumers that accept feature-major output can take `out_t` directly.
    return out_t.T


def init_params(key, in_dim, out_dim, hidden=64):
    """nn.Linear default init (U[-1/sqrt(fan_in), 1/sqrt(fan_in)]),
    PyTorch [fan_out, fan_in] weight layout, biases as [fan_out, 1]."""
    ks = jax.random.split(key, 6)

    def linear(kw, kb, fan_in, fan_out):
        bound = 1.0 / jnp.sqrt(jnp.float32(fan_in))
        w = jax.random.uniform(kw, (fan_out, fan_in), jnp.float32, -bound, bound)
        b = jax.random.uniform(kb, (fan_out, 1), jnp.float32, -bound, bound)
        return w, b

    w1, b1 = linear(ks[0], ks[1], in_dim, hidden)
    w2, b2 = linear(ks[2], ks[3], hidden, hidden)
    w3, b3 = linear(ks[4], ks[5], hidden, out_dim)
    return {"w1": w1, "b1": b1, "w2": w2, "b2": b2, "w3": w3, "b3": b3}


def _reference(obs, p):
    h1 = obs @ p["w1"].T + p["b1"][:, 0]
    h1 = jnp.where(h1 > 0, h1, 0.01 * h1)
    h2 = h1 @ p["w2"].T + p["b2"][:, 0]
    h2 = jnp.where(h2 > 0, h2, 0.01 * h2)
    return h2 @ p["w3"].T + p["b3"][:, 0]


if __name__ == "__main__":
    key = jax.random.PRNGKey(0)
    k_obs, k_obs2, k_param = jax.random.split(key, 3)

    in_dim, out_dim = 16, 2  # small critic: obs dim 16, 2-agent value head
    params = init_params(k_param, in_dim, out_dim)

    # Small case (single ragged tile, B < 128, no padding copy in the wrapper).
    obs = jax.random.normal(k_obs, (8, in_dim), jnp.float32)
    out = jax.block_until_ready(feedforward_crit_2(obs, params))
    ref = _reference(obs, params)
    assert out.shape == (8, out_dim)
    assert jnp.allclose(out, ref, atol=1e-4, rtol=1e-4)

    # Multi-step grid with a ragged tail (B=300, tile=128 -> 3 steps).
    obs2 = jax.random.normal(k_obs2, (300, in_dim), jnp.float32)
    out2 = jax.block_until_ready(feedforward_crit_2(obs2, params, batch_tile=128))
    ref2 = _reference(obs2, params)
    assert out2.shape == (300, out_dim)
    assert jnp.allclose(out2, ref2, atol=1e-4, rtol=1e-4)

    # bf16 matmul-operand path (in-kernel obs cast, f32 accumulation).
    out3 = jax.block_until_ready(
        feedforward_crit_2(obs2, params, compute_dtype=jnp.bfloat16))
    assert out3.shape == (300, out_dim)
    assert bool(jnp.all(jnp.isfinite(out3)))
    assert jnp.allclose(out3, ref2, atol=5e-2, rtol=5e-2)

    print("KERNEL_OK")
</pallas_src>

<mosaic_0001>
module attributes {stable_mosaic.version = 11 : i64} {
  func.func @_mlp_kernel(%arg0: i32, %arg1: memref<128x16xf32, #tpu.memory_space<vmem>>, %arg2: memref<64x16xf32, #tpu.memory_space<vmem>>, %arg3: memref<64x1xf32, #tpu.memory_space<vmem>>, %arg4: memref<64x64xf32, #tpu.memory_space<vmem>>, %arg5: memref<64x1xf32, #tpu.memory_space<vmem>>, %arg6: memref<2x64xf32, #tpu.memory_space<vmem>>, %arg7: memref<2x1xf32, #tpu.memory_space<vmem>>, %arg8: memref<2x128xf32, #tpu.memory_space<vmem>>) attributes {dimension_semantics = [#tpu.dimension_semantics<parallel>], iteration_bounds = array<i64: 1>, scalar_prefetch = 0 : i64, scratch_operands = 0 : i64, tpu.core_type = #tpu.core_type<tc>, window_params = [{transform_indices = @transform_0, window_bounds = array<i64: 128, 16>}, {pipeline_mode = #tpu.pipeline_mode<synchronous>, transform_indices = @transform_1, window_bounds = array<i64: 64, 16>}, {pipeline_mode = #tpu.pipeline_mode<synchronous>, transform_indices = @transform_2, window_bounds = array<i64: 64, 1>}, {pipeline_mode = #tpu.pipeline_mode<synchronous>, transform_indices = @transform_3, window_bounds = array<i64: 64, 64>}, {pipeline_mode = #tpu.pipeline_mode<synchronous>, transform_indices = @transform_4, window_bounds = array<i64: 64, 1>}, {pipeline_mode = #tpu.pipeline_mode<synchronous>, transform_indices = @transform_5, window_bounds = array<i64: 2, 64>}, {pipeline_mode = #tpu.pipeline_mode<synchronous>, transform_indices = @transform_6, window_bounds = array<i64: 2, 1>}, {transform_indices = @transform_7, window_bounds = array<i64: 2, 128>}]} {
    %c0 = arith.constant 0 : index
    %c0_0 = arith.constant 0 : index
    %0 = vector.load %arg1[%c0, %c0_0] : memref<128x16xf32, #tpu.memory_space<vmem>>, vector<128x16xf32>
    %c0_1 = arith.constant 0 : index
    %c0_2 = arith.constant 0 : index
    %1 = vector.load %arg2[%c0_1, %c0_2] : memref<64x16xf32, #tpu.memory_space<vmem>>, vector<64x16xf32>
    %cst = arith.constant dense<0.000000e+00> : vector<64x128xf32>
    %2 = tpu.matmul %1, %0, %cst {dimension_numbers = #tpu.dot_dimension_numbers<[1], [1], [0], [0], [0, 0, 1, 0], [], []>} : vector<64x16xf32>, vector<128x16xf32>, vector<64x128xf32> -> vector<64x128xf32>
    %c0_3 = arith.constant 0 : index
    %c0_4 = arith.constant 0 : index
    %3 = vector.load %arg3[%c0_3, %c0_4] : memref<64x1xf32, #tpu.memory_space<vmem>>, vector<64x1xf32>
    %4 = vector.broadcast %3 : vector<64x1xf32> to vector<64x128xf32>
    %5 = arith.addf %2, %4 : vector<64x128xf32>
    %cst_5 = arith.constant 0.000000e+00 : f32
    %6 = vector.broadcast %cst_5 : f32 to vector<64x128xf32>
    %7 = arith.cmpf ogt, %5, %6 : vector<64x128xf32>
    %cst_6 = arith.constant 0.00999999977 : f32
    %8 = vector.broadcast %cst_6 : f32 to vector<64x128xf32>
    %9 = arith.mulf %8, %5 : vector<64x128xf32>
    %10 = arith.select %7, %5, %9 : vector<64x128xi1>, vector<64x128xf32>
    %c0_7 = arith.constant 0 : index
    %c0_8 = arith.constant 0 : index
    %11 = vector.load %arg4[%c0_7, %c0_8] : memref<64x64xf32, #tpu.memory_space<vmem>>, vector<64x64xf32>
    %cst_9 = arith.constant dense<0.000000e+00> : vector<64x128xf32>
    %12 = tpu.matmul %11, %10, %cst_9 {dimension_numbers = #tpu.dot_dimension_numbers<[1], [0], [0], [1], [0, 0, 1, 1], [], []>} : vector<64x64xf32>, vector<64x128xf32>, vector<64x128xf32> -> vector<64x128xf32>
    %c0_10 = arith.constant 0 : index
    %c0_11 = arith.constant 0 : index
    %13 = vector.load %arg5[%c0_10, %c0_11] : memref<64x1xf32, #tpu.memory_space<vmem>>, vector<64x1xf32>
    %14 = vector.broadcast %13 : vector<64x1xf32> to vector<64x128xf32>
    %15 = arith.addf %12, %14 : vector<64x128xf32>
    %cst_12 = arith.constant 0.000000e+00 : f32
    %16 = vector.broadcast %cst_12 : f32 to vector<64x128xf32>
    %17 = arith.cmpf ogt, %15, %16 : vector<64x128xf32>
    %cst_13 = arith.constant 0.00999999977 : f32
    %18 = vector.broadcast %cst_13 : f32 to vector<64x128xf32>
    %19 = arith.mulf %18, %15 : vector<64x128xf32>
    %20 = arith.select %17, %15, %19 : vector<64x128xi1>, vector<64x128xf32>
    %c0_14 = arith.constant 0 : index
    %c0_15 = arith.constant 0 : index
    %21 = vector.load %arg6[%c0_14, %c0_15] : memref<2x64xf32, #tpu.memory_space<vmem>>, vector<2x64xf32>
    %cst_16 = arith.constant dense<0.000000e+00> : vector<2x128xf32>
    %22 = tpu.matmul %21, %20, %cst_16 {dimension_numbers = #tpu.dot_dimension_numbers<[1], [0], [0], [1], [0, 0, 1, 1], [], []>} : vector<2x64xf32>, vector<64x128xf32>, vector<2x128xf32> -> vector<2x128xf32>
    %c0_17 = arith.constant 0 : index
    %c0_18 = arith.constant 0 : index
    %23 = vector.load %arg7[%c0_17, %c0_18] : memref<2x1xf32, #tpu.memory_space<vmem>>, vector<2x1xf32>
    %24 = vector.broadcast %23 : vector<2x1xf32> to vector<2x128xf32>
    %25 = arith.addf %22, %24 : vector<2x128xf32>
    %c0_19 = arith.constant 0 : index
    %c0_20 = arith.constant 0 : index
    %26 = vector.load %arg8[%c0_19, %c0_20] : memref<2x128xf32, #tpu.memory_space<vmem>>, vector<2x128xf32>
    tpu.vector_store %arg8[%c0_19, %c0_20], %25 {strides = array<i32>} : memref<2x128xf32, #tpu.memory_space<vmem>>, vector<2x128xf32>,
    return
  }
  func.func @transform_0(%arg0: i32) -> (i32, i32) {
    %c0_i32 = arith.constant 0 : i32
    %c0_i32_0 = arith.constant 0 : i32
    return %arg0, %c0_i32 : i32, i32
  }
  func.func @transform_1(%arg0: i32) -> (i32, i32) {
    %c0_i32 = arith.constant 0 : i32
    %c0_i32_0 = arith.constant 0 : i32
    %c0_i32_1 = arith.constant 0 : i32
    return %c0_i32, %c0_i32_0 : i32, i32
  }
  func.func @transform_2(%arg0: i32) -> (i32, i32) {
    %c0_i32 = arith.constant 0 : i32
    %c0_i32_0 = arith.constant 0 : i32
    %c0_i32_1 = arith.constant 0 : i32
    return %c0_i32, %c0_i32_0 : i32, i32
  }
  func.func @transform_3(%arg0: i32) -> (i32, i32) {
    %c0_i32 = arith.constant 0 : i32
    %c0_i32_0 = arith.constant 0 : i32
    %c0_i32_1 = arith.constant 0 : i32
    return %c0_i32, %c0_i32_0 : i32, i32
  }
  func.func @transform_4(%arg0: i32) -> (i32, i32) {
    %c0_i32 = arith.constant 0 : i32
    %c0_i32_0 = arith.constant 0 : i32
    %c0_i32_1 = arith.constant 0 : i32
    return %c0_i32, %c0_i32_0 : i32, i32
  }
  func.func @transform_5(%arg0: i32) -> (i32, i32) {
    %c0_i32 = arith.constant 0 : i32
    %c0_i32_0 = arith.constant 0 : i32
    %c0_i32_1 = arith.constant 0 : i32
    return %c0_i32, %c0_i32_0 : i32, i32
  }
  func.func @transform_6(%arg0: i32) -> (i32, i32) {
    %c0_i32 = arith.constant 0 : i32
    %c0_i32_0 = arith.constant 0 : i32
    %c0_i32_1 = arith.constant 0 : i32
    return %c0_i32, %c0_i32_0 : i32, i32
  }
  func.func @transform_7(%arg0: i32) -> (i32, i32) {
    %c0_i32 = arith.constant 0 : i32
    %c0_i32_0 = arith.constant 0 : i32
    return %c0_i32, %arg0 : i32, i32
  }
}

</mosaic_0001>

<llo_original>
// kernel: feedforward_crit_2.1
$region0: #{feedforward_crit_2.1}
  #allocation0 [shape = 'u32[]', space=smem, size = 0x4, offset = 0x4, fixed_abs, tag = 'smem constant byte address 0x4 - core index']
  #allocation1 [shape = 'u32[144,128]{1,0:T(1,128)}', space=vmem, size = 0x12000, scoped, tag = 'internal scratch']
  %s0 = inlined_call_operand.vmem [shape: f32[8,16], index: 0, kind: input, shape index: {}]
  %s1 = inlined_call_operand.vmem [shape: f32[64,16], index: 1, kind: input, shape index: {}]
  %s2 = inlined_call_operand.vmem [shape: f32[64,1], index: 2, kind: input, shape index: {}]
  %s3 = inlined_call_operand.vmem [shape: f32[64,64], index: 3, kind: input, shape index: {}]
  %s4 = inlined_call_operand.vmem [shape: f32[64,1], index: 4, kind: input, shape index: {}]
  %s5 = inlined_call_operand.vmem [shape: f32[2,64], index: 5, kind: input, shape index: {}]
  %s6 = inlined_call_operand.vmem [shape: f32[2,1], index: 6, kind: input, shape index: {}]
  %s7 = inlined_call_operand.hbm [shape: f32[2,8], index: 7, kind: output, shape index: {}]
  %s8 = sld [smem:[#allocation0]]
  $region38: #{feedforward_crit_2.1} parent=0
    _
  %s10 = ssub.s32 1, %s8
  %s11 = scalar_select 0, %s10, %s8
  $region1: #{feedforward_crit_2.1} parent=0
    #allocation2 [shape = 'u8[1024]{0}', space=vmem, size = 0x400, scoped, tag = 'output window, operand 0, single buffered']
    #allocation3 [shape = 's32[1]{0}', space=sflag, size = 0x4, scoped, tag = 'scoped memory for feedforward_crit_2.1']
    %12 = vsyncpa [#allocation3], 0
    // Predicated region
    $region2: #{feedforward_crit_2.1} parent=1 // pred_check
      _
    $region3: #{feedforward_crit_2.1} parent=1 // pred_check_branch
      %14 = sbr.rel (0) target = $region5
    $region4: #{feedforward_crit_2.1} parent=1 // pred_region
      _
    $region5: #{feedforward_crit_2.1} parent=1 // pred_fallthru
      _
    // Predicated region
    $region6: #{feedforward_crit_2.1} parent=1 // pred_check
      _
    $region7: #{feedforward_crit_2.1} parent=1 // pred_check_branch
      %16 = sbr.rel (0) target = $region9
    $region8: #{feedforward_crit_2.1} parent=1 // pred_region
      _
    $region9: #{feedforward_crit_2.1} parent=1 // pred_fallthru
      _
    // Predicated region
    $region10: #{feedforward_crit_2.1} parent=1 // pred_check
      _
    $region11: #{feedforward_crit_2.1} parent=1 // pred_check_branch
      %18 = sbr.rel (0) target = $region13
    $region12: #{feedforward_crit_2.1} parent=1 // pred_region
      _
    $region13: #{feedforward_crit_2.1} parent=1 // pred_fallthru
      _
    // Predicated region
    $region14: #{feedforward_crit_2.1} parent=1 // pred_check
      _
    $region15: #{feedforward_crit_2.1} parent=1 // pred_check_branch
      %20 = sbr.rel (0) target = $region17
    $region16: #{feedforward_crit_2.1} parent=1 // pred_region
      _
    $region17: #{feedforward_crit_2.1} parent=1 // pred_fallthru
      _
    // Predicated region
    $region18: #{feedforward_crit_2.1} parent=1 // pred_check
      _
    $region19: #{feedforward_crit_2.1} parent=1 // pred_check_branch
      %22 = sbr.rel (0) target = $region21
    $region20: #{feedforward_crit_2.1} parent=1 // pred_region
      _
    $region21: #{feedforward_crit_2.1} parent=1 // pred_fallthru
      _
    // Predicated region
    $region22: #{feedforward_crit_2.1} parent=1 // pred_check
      _
    $region23: #{feedforward_crit_2.1} parent=1 // pred_check_branch
      %24 = sbr.rel (0) target = $region25
    $region24: #{feedforward_crit_2.1} parent=1 // pred_region
      _
    $region25: #{feedforward_crit_2.1} parent=1 // pred_fallthru
      _
    // Predicated region
    $region26: #{feedforward_crit_2.1} parent=1 // pred_check
      _
    $region27: #{feedforward_crit_2.1} parent=1 // pred_check_branch
      %26 = sbr.rel (0) target = $region29
    $region28: #{feedforward_crit_2.1} parent=1 // pred_region
      _
    $region29: #{feedforward_crit_2.1} parent=1 // pred_fallthru
      _
    %v27 = vld [vmem:[%s0] sm:$0xff]
    %v28 = vld [vmem:[%s0 + $0x8] sm:$0xff]
    %v29 = vld [vmem:[%s0 + $0x10] sm:$0xff]
    %v30 = vld [vmem:[%s0 + $0x18] sm:$0xff]
    %v31 = vld [vmem:[%s0 + $0x20] sm:$0xff]
    %v32 = vld [vmem:[%s0 + $0x28] sm:$0xff]
    %v33 = vld [vmem:[%s0 + $0x30] sm:$0xff]
    %v34 = vld [vmem:[%s0 + $0x38] sm:$0xff]
    %v35 = vld [vmem:[%s0 + $0x40] sm:$0xff]
    %v36 = vld [vmem:[%s0 + $0x48] sm:$0xff]
    %v37 = vld [vmem:[%s0 + $0x50] sm:$0xff]
    %v38 = vld [vmem:[%s0 + $0x58] sm:$0xff]
    %v39 = vld [vmem:[%s0 + $0x60] sm:$0xff]
    %v40 = vld [vmem:[%s0 + $0x68] sm:$0xff]
    %v41 = vld [vmem:[%s0 + $0x70] sm:$0xff]
    %v42 = vld [vmem:[%s0 + $0x78] sm:$0xff]
    %v43 = vld [vmem:[%s1] sm:$0xff]
    %v44 = vld [vmem:[%s1 + $0x8] sm:$0xff]
    %v45 = vld [vmem:[%s1 + $0x10] sm:$0xff]
    %v46 = vld [vmem:[%s1 + $0x18] sm:$0xff]
    %v47 = vld [vmem:[%s1 + $0x20] sm:$0xff]
    %v48 = vld [vmem:[%s1 + $0x28] sm:$0xff]
    %v49 = vld [vmem:[%s1 + $0x30] sm:$0xff]
    %v50 = vld [vmem:[%s1 + $0x38] sm:$0xff]
    %v51 = vld [vmem:[%s2] sm:$0xff]
    %v52 = vld [vmem:[%s2 + $0x8] sm:$0xff]
    %v53 = vld [vmem:[%s2 + $0x10] sm:$0xff]
    %v54 = vld [vmem:[%s2 + $0x18] sm:$0xff]
    %v55 = vld [vmem:[%s2 + $0x20] sm:$0xff]
    %v56 = vld [vmem:[%s2 + $0x28] sm:$0xff]
    %v57 = vld [vmem:[%s2 + $0x30] sm:$0xff]
    %v58 = vld [vmem:[%s2 + $0x38] sm:$0xff]
    %60 = vset.pattern.permute.xlu0 0
    %61 = vperm.xlu0 %60, %v51
    %v62 = vpop.permute.xlu0 %61
    %65 = vset.pattern.permute.xlu0 0
    %66 = vperm.xlu0 %65, %v52
    %v67 = vpop.permute.xlu0 %66
    %70 = vset.pattern.permute.xlu0 0
    %71 = vperm.xlu0 %70, %v53
    %v72 = vpop.permute.xlu0 %71
    %75 = vset.pattern.permute.xlu0 0
    %76 = vperm.xlu0 %75, %v54
    %v77 = vpop.permute.xlu0 %76
    %80 = vset.pattern.permute.xlu0 0
    %81 = vperm.xlu0 %80, %v55
    %v82 = vpop.permute.xlu0 %81
    %85 = vset.pattern.permute.xlu0 0
    %86 = vperm.xlu0 %85, %v56
    %v87 = vpop.permute.xlu0 %86
    %90 = vset.pattern.permute.xlu0 0
    %91 = vperm.xlu0 %90, %v57
    %v92 = vpop.permute.xlu0 %91
    %95 = vset.pattern.permute.xlu0 0
    %96 = vperm.xlu0 %95, %v58
    %v97 = vpop.permute.xlu0 %96
    %vm99 = vcmask 130048
    %v101 = vsel %vm99, %v43, 0
    %v104 = vsel %vm99, %v44, 0
    %v107 = vsel %vm99, %v45, 0
    %v110 = vsel %vm99, %v46, 0
    %v113 = vsel %vm99, %v47, 0
    %v116 = vsel %vm99, %v48, 0
    %v119 = vsel %vm99, %v49, 0
    %v122 = vsel %vm99, %v50, 0
    %v125 = vsel %vm99, %v27, 0
    %v128 = vsel %vm99, %v28, 0
    %v131 = vsel %vm99, %v29, 0
    %v134 = vsel %vm99, %v30, 0
    %v137 = vsel %vm99, %v31, 0
    %v140 = vsel %vm99, %v32, 0
    %v143 = vsel %vm99, %v33, 0
    %v146 = vsel %vm99, %v34, 0
    %v149 = vsel %vm99, %v35, 0
    %v152 = vsel %vm99, %v36, 0
    %v155 = vsel %vm99, %v37, 0
    %v158 = vsel %vm99, %v38, 0
    %v161 = vsel %vm99, %v39, 0
    %v164 = vsel %vm99, %v40, 0
    %v167 = vsel %vm99, %v41, 0
    %v170 = vsel %vm99, %v42, 0
    %172 = vmatprep.subr.mxu0 0.0
    %173 = vmatpush1.xpose.msra.mxu0 %v125
    %174 = vmatprep.subr.mxu0 0.0
    %175 = vmatpush1.xpose.msra.mxu0 %v128
    %176 = vmatprep.subr.mxu0 0.0
    %177 = vmatpush1.xpose.msra.mxu0 %v131
    %178 = vmatprep.subr.mxu0 0.0
    %179 = vmatpush1.xpose.msra.mxu0 %v134
    %180 = vmatprep.subr.mxu0 0.0
    %181 = vmatpush1.xpose.msra.mxu0 %v137
    %182 = vmatprep.subr.mxu0 0.0
    %183 = vmatpush1.xpose.msra.mxu0 %v140
    %184 = vmatprep.subr.mxu0 0.0
    %185 = vmatpush1.xpose.msra.mxu0 %v143
    %186 = vmatprep.subr.mxu0 0.0
    %187 = vmatpush1.xpose.msra.mxu0 %v146
    %188 = vmatprep.subr.mxu0 0.0
    %189 = vmatpush1.xpose.msra.mxu0 %v149
    %190 = vmatprep.subr.mxu0 0.0
    %191 = vmatpush1.xpose.msra.mxu0 %v152
    %192 = vmatprep.subr.mxu0 0.0
    %193 = vmatpush1.xpose.msra.mxu0 %v155
    %194 = vmatprep.subr.mxu0 0.0
    %195 = vmatpush1.xpose.msra.mxu0 %v158
    %196 = vmatprep.subr.mxu0 0.0
    %197 = vmatpush1.xpose.msra.mxu0 %v161
    %198 = vmatprep.subr.mxu0 0.0
    %199 = vmatpush1.xpose.msra.mxu0 %v164
    %200 = vmatprep.subr.mxu0 0.0
    %201 = vmatpush1.xpose.msra.mxu0 %v167
    %202 = vmatprep.subr.mxu0 0.0
    %203 = vmatpush1.xpose.msra.mxu0 %v170
    %204 = vmatprep.subr.mxu0 0.0
    %205 = vmatpush1.xpose.msra.mxu0 0.0
    %206 = vmatprep.subr.mxu0 0.0
    %207 = vmatpush1.xpose.msra.mxu0 0.0
    %208 = vmatprep.subr.mxu0 0.0
    %209 = vmatpush1.xpose.msra.mxu0 0.0
    %210 = vmatprep.subr.mxu0 0.0
    %211 = vmatpush1.xpose.msra.mxu0 0.0
    %212 = vmatprep.subr.mxu0 0.0
    %213 = vmatpush1.xpose.msra.mxu0 0.0
    %214 = vmatprep.subr.mxu0 0.0
    %215 = vmatpush1.xpose.msra.mxu0 0.0
    %216 = vmatprep.subr.mxu0 0.0
    %217 = vmatpush1.xpose.msra.mxu0 0.0
    %218 = vmatprep.subr.mxu0 0.0
    %219 = vmatpush1.xpose.msra.mxu0 0.0
    %220 = vmatprep.subr.mxu0 0.0
    %221 = vmatpush1.xpose.msra.mxu0 0.0
    %222 = vmatprep.subr.mxu0 0.0
    %223 = vmatpush1.xpose.msra.mxu0 0.0
    %224 = vmatprep.subr.mxu0 0.0
    %225 = vmatpush1.xpose.msra.mxu0 0.0
    %226 = vmatprep.subr.mxu0 0.0
    %227 = vmatpush1.xpose.msra.mxu0 0.0
    %228 = vmatprep.subr.mxu0 0.0
    %229 = vmatpush1.xpose.msra.mxu0 0.0
    %230 = vmatprep.subr.mxu0 0.0
    %231 = vmatpush1.xpose.msra.mxu0 0.0
    %232 = vmatprep.subr.mxu0 0.0
    %233 = vmatpush1.xpose.msra.mxu0 0.0
    %234 = vmatprep.subr.mxu0 0.0
    %235 = vmatpush1.xpose.msra.mxu0 0.0
    %236 = vmatprep.mubr.f32.mxu0 0.0
    %237 = vmatmul.mubr.f32.gmra.mrb[0].mxu0 %v101
    %v238 = vpop.f32.mrb[0].mxu0
    %v239 = vadd.f32 %v62, %v238
    %v240 = vpop.f32.mrb[0].mxu0
    %241 = vmatprep.mubr.f32.mxu0 0.0
    %242 = vmatmul.mubr.f32.gmra.mrb[0].mxu0 %v104
    %v243 = vpop.f32.mrb[0].mxu0
    %v244 = vadd.f32 %v67, %v243
    %v245 = vpop.f32.mrb[0].mxu0
    %246 = vmatprep.mubr.f32.mxu0 0.0
    %247 = vmatmul.mubr.f32.gmra.mrb[0].mxu0 %v107
    %v248 = vpop.f32.mrb[0].mxu0
    %v249 = vadd.f32 %v72, %v248
    %v250 = vpop.f32.mrb[0].mxu0
    %251 = vmatprep.mubr.f32.mxu0 0.0
    %252 = vmatmul.mubr.f32.gmra.mrb[0].mxu0 %v110
    %v253 = vpop.f32.mrb[0].mxu0
    %v254 = vadd.f32 %v77, %v253
    %v255 = vpop.f32.mrb[0].mxu0
    %256 = vmatprep.mubr.f32.mxu0 0.0
    %257 = vmatmul.mubr.f32.gmra.mrb[0].mxu0 %v113
    %v258 = vpop.f32.mrb[0].mxu0
    %v259 = vadd.f32 %v82, %v258
    %v260 = vpop.f32.mrb[0].mxu0
    %261 = vmatprep.mubr.f32.mxu0 0.0
    %262 = vmatmul.mubr.f32.gmra.mrb[0].mxu0 %v116
    %v263 = vpop.f32.mrb[0].mxu0
    %v264 = vadd.f32 %v87, %v263
    %v265 = vpop.f32.mrb[0].mxu0
    %266 = vmatprep.mubr.f32.mxu0 0.0
    %267 = vmatmul.mubr.f32.gmra.mrb[0].mxu0 %v119
    %v268 = vpop.f32.mrb[0].mxu0
    %v269 = vadd.f32 %v92, %v268
    %v270 = vpop.f32.mrb[0].mxu0
    %271 = vmatprep.mubr.f32.mxu0 0.0
    %272 = vmatmul.mubr.f32.gmra.mrb[0].mxu0 %v122
    %v273 = vpop.f32.mrb[0].mxu0
    %v274 = vadd.f32 %v97, %v273
    %v275 = vpop.f32.mrb[0].mxu0
    %276 = vdwg.mxu0
    %vm277 = vcmp.gt.f32.partialorder %v239, 0.0
    %vm278 = vcmp.gt.f32.partialorder %v244, 0.0
    %vm279 = vcmp.gt.f32.partialorder %v249, 0.0
    %vm280 = vcmp.gt.f32.partialorder %v254, 0.0
    %vm281 = vcmp.gt.f32.partialorder %v259, 0.0
    %vm282 = vcmp.gt.f32.partialorder %v264, 0.0
    %vm283 = vcmp.gt.f32.partialorder %v269, 0.0
    %vm284 = vcmp.gt.f32.partialorder %v274, 0.0
    %v285 = vmul.f32 %v239, 0.01
    %v286 = vmul.f32 %v244, 0.01
    %v287 = vmul.f32 %v249, 0.01
    %v288 = vmul.f32 %v254, 0.01
    %v289 = vmul.f32 %v259, 0.01
    %v290 = vmul.f32 %v264, 0.01
    %v291 = vmul.f32 %v269, 0.01
    %v292 = vmul.f32 %v274, 0.01
    %v293 = vsel %vm277, %v239, %v285
    %v294 = vsel %vm278, %v244, %v286
    %v295 = vsel %vm279, %v249, %v287
    %v296 = vsel %vm280, %v254, %v288
    %v297 = vsel %vm281, %v259, %v289
    %v298 = vsel %vm282, %v264, %v290
    %v299 = vsel %vm283, %v269, %v291
    %v300 = vsel %vm284, %v274, %v292
    %v301 = vld [vmem:[%s3] sm:$0xff]
    %v302 = vld [vmem:[%s3 + $0x8] sm:$0xff]
    %v303 = vld [vmem:[%s3 + $0x10] sm:$0xff]
    %v304 = vld [vmem:[%s3 + $0x18] sm:$0xff]
    %v305 = vld [vmem:[%s3 + $0x20] sm:$0xff]
    %v306 = vld [vmem:[%s3 + $0x28] sm:$0xff]
    %v307 = vld [vmem:[%s3 + $0x30] sm:$0xff]
    %v308 = vld [vmem:[%s3 + $0x38] sm:$0xff]
    %v309 = vld [vmem:[%s4] sm:$0xff]
    %v310 = vld [vmem:[%s4 + $0x8] sm:$0xff]
    %v311 = vld [vmem:[%s4 + $0x10] sm:$0xff]
    %v312 = vld [vmem:[%s4 + $0x18] sm:$0xff]
    %v313 = vld [vmem:[%s4 + $0x20] sm:$0xff]
    %v314 = vld [vmem:[%s4 + $0x28] sm:$0xff]
    %v315 = vld [vmem:[%s4 + $0x30] sm:$0xff]
    %v316 = vld [vmem:[%s4 + $0x38] sm:$0xff]
    %318 = vset.pattern.permute.xlu0 0
    %319 = vperm.xlu0 %318, %v309
    %v320 = vpop.permute.xlu0 %319
    %323 = vset.pattern.permute.xlu0 0
    %324 = vperm.xlu0 %323, %v310
    %v325 = vpop.permute.xlu0 %324
    %328 = vset.pattern.permute.xlu0 0
    %329 = vperm.xlu0 %328, %v311
    %v330 = vpop.permute.xlu0 %329
    %333 = vset.pattern.permute.xlu0 0
    %334 = vperm.xlu0 %333, %v312
    %v335 = vpop.permute.xlu0 %334
    %338 = vset.pattern.permute.xlu0 0
    %339 = vperm.xlu0 %338, %v313
    %v340 = vpop.permute.xlu0 %339
    %343 = vset.pattern.permute.xlu0 0
    %344 = vperm.xlu0 %343, %v314
    %v345 = vpop.permute.xlu0 %344
    %348 = vset.pattern.permute.xlu0 0
    %349 = vperm.xlu0 %348, %v315
    %v350 = vpop.permute.xlu0 %349
    %353 = vset.pattern.permute.xlu0 0
    %354 = vperm.xlu0 %353, %v316
    %v355 = vpop.permute.xlu0 %354
    %vm357 = vcmask 523264
    %v359 = vsel %vm357, %v301, 0
    %v362 = vsel %vm357, %v302, 0
    %v365 = vsel %vm357, %v303, 0
    %v368 = vsel %vm357, %v304, 0
    %v371 = vsel %vm357, %v305, 0
    %v374 = vsel %vm357, %v306, 0
    %v377 = vsel %vm357, %v307, 0
    %v380 = vsel %vm357, %v308, 0
    %382 = vmatprep.subr.mxu0 0.0
    %383 = vmatpush1.msra.mxu0 %v293
    %384 = vmatprep.subr.mxu0 0.0
    %385 = vmatpush1.msra.mxu0 %v294
    %386 = vmatprep.subr.mxu0 0.0
    %387 = vmatpush1.msra.mxu0 %v295
    %388 = vmatprep.subr.mxu0 0.0
    %389 = vmatpush1.msra.mxu0 %v296
    %390 = vmatprep.subr.mxu0 0.0
    %391 = vmatpush1.msra.mxu0 %v297
    %392 = vmatprep.subr.mxu0 0.0
    %393 = vmatpush1.msra.mxu0 %v298
    %394 = vmatprep.subr.mxu0 0.0
    %395 = vmatpush1.msra.mxu0 %v299
    %396 = vmatprep.subr.mxu0 0.0
    %397 = vmatpush1.msra.mxu0 %v300
    %398 = vmatprep.subr.mxu0 0.0
    %399 = vmatpush1.msra.mxu0 0.0
    %400 = vmatprep.subr.mxu0 0.0
    %401 = vmatpush1.msra.mxu0 0.0
    %402 = vmatprep.subr.mxu0 0.0
    %403 = vmatpush1.msra.mxu0 0.0
    %404 = vmatprep.subr.mxu0 0.0
    %405 = vmatpush1.msra.mxu0 0.0
    %406 = vmatprep.subr.mxu0 0.0
    %407 = vmatpush1.msra.mxu0 0.0
    %408 = vmatprep.subr.mxu0 0.0
    %409 = vmatpush1.msra.mxu0 0.0
    %410 = vmatprep.subr.mxu0 0.0
    %411 = vmatpush1.msra.mxu0 0.0
    %412 = vmatprep.subr.mxu0 0.0
    %413 = vmatpush1.msra.mxu0 0.0
    %414 = vmatprep.subr.mxu0 0.0
    %415 = vmatpush1.msra.mxu0 0.0
    %416 = vmatprep.subr.mxu0 0.0
    %417 = vmatpush1.msra.mxu0 0.0
    %418 = vmatprep.subr.mxu0 0.0
    %419 = vmatpush1.msra.mxu0 0.0
    %420 = vmatprep.subr.mxu0 0.0
    %421 = vmatpush1.msra.mxu0 0.0
    %422 = vmatprep.subr.mxu0 0.0
    %423 = vmatpush1.msra.mxu0 0.0
    %424 = vmatprep.subr.mxu0 0.0
    %425 = vmatpush1.msra.mxu0 0.0
    %426 = vmatprep.subr.mxu0 0.0
    %427 = vmatpush1.msra.mxu0 0.0
    %428 = vmatprep.subr.mxu0 0.0
    %429 = vmatpush1.msra.mxu0 0.0
    %430 = vmatprep.subr.mxu0 0.0
    %431 = vmatpush1.msra.mxu0 0.0
    %432 = vmatprep.subr.mxu0 0.0
    %433 = vmatpush1.msra.mxu0 0.0
    %434 = vmatprep.subr.mxu0 0.0
    %435 = vmatpush1.msra.mxu0 0.0
    %436 = vmatprep.subr.mxu0 0.0
    %437 = vmatpush1.msra.mxu0 0.0
    %438 = vmatprep.subr.mxu0 0.0
    %439 = vmatpush1.msra.mxu0 0.0
    %440 = vmatprep.subr.mxu0 0.0
    %441 = vmatpush1.msra.mxu0 0.0
    %442 = vmatprep.subr.mxu0 0.0
    %443 = vmatpush1.msra.mxu0 0.0
    %444 = vmatprep.subr.mxu0 0.0
    %445 = vmatpush1.msra.mxu0 0.0
    %446 = vmatprep.mubr.f32.mxu0 0.0
    %447 = vmatmul.mubr.f32.gmra.mrb[0].mxu0 %v359
    %v448 = vpop.f32.mrb[0].mxu0
    %v449 = vadd.f32 %v320, %v448
    %v450 = vpop.f32.mrb[0].mxu0
    %451 = vmatprep.mubr.f32.mxu0 0.0
    %452 = vmatmul.mubr.f32.gmra.mrb[0].mxu0 %v362
    %v453 = vpop.f32.mrb[0].mxu0
    %v454 = vadd.f32 %v325, %v453
    %v455 = vpop.f32.mrb[0].mxu0
    %456 = vmatprep.mubr.f32.mxu0 0.0
    %457 = vmatmul.mubr.f32.gmra.mrb[0].mxu0 %v365
    %v458 = vpop.f32.mrb[0].mxu0
    %v459 = vadd.f32 %v330, %v458
    %v460 = vpop.f32.mrb[0].mxu0
    %461 = vmatprep.mubr.f32.mxu0 0.0
    %462 = vmatmul.mubr.f32.gmra.mrb[0].mxu0 %v368
    %v463 = vpop.f32.mrb[0].mxu0
    %v464 = vadd.f32 %v335, %v463
    %v465 = vpop.f32.mrb[0].mxu0
    %466 = vmatprep.mubr.f32.mxu0 0.0
    %467 = vmatmul.mubr.f32.gmra.mrb[0].mxu0 %v371
    %v468 = vpop.f32.mrb[0].mxu0
    %v469 = vadd.f32 %v340, %v468
    %v470 = vpop.f32.mrb[0].mxu0
    %471 = vmatprep.mubr.f32.mxu0 0.0
    %472 = vmatmul.mubr.f32.gmra.mrb[0].mxu0 %v374
    %v473 = vpop.f32.mrb[0].mxu0
    %v474 = vadd.f32 %v345, %v473
    %v475 = vpop.f32.mrb[0].mxu0
    %476 = vmatprep.mubr.f32.mxu0 0.0
    %477 = vmatmul.mubr.f32.gmra.mrb[0].mxu0 %v377
    %v478 = vpop.f32.mrb[0].mxu0
    %v479 = vadd.f32 %v350, %v478
    %v480 = vpop.f32.mrb[0].mxu0
    %481 = vmatprep.mubr.f32.mxu0 0.0
    %482 = vmatmul.mubr.f32.gmra.mrb[0].mxu0 %v380
    %v483 = vpop.f32.mrb[0].mxu0
    %v484 = vadd.f32 %v355, %v483
    %v485 = vpop.f32.mrb[0].mxu0
    %486 = vdwg.mxu0
    %vm487 = vcmp.gt.f32.partialorder %v449, 0.0
    %vm488 = vcmp.gt.f32.partialorder %v454, 0.0
    %vm489 = vcmp.gt.f32.partialorder %v459, 0.0
    %vm490 = vcmp.gt.f32.partialorder %v464, 0.0
    %vm491 = vcmp.gt.f32.partialorder %v469, 0.0
    %vm492 = vcmp.gt.f32.partialorder %v474, 0.0
    %vm493 = vcmp.gt.f32.partialorder %v479, 0.0
    %vm494 = vcmp.gt.f32.partialorder %v484, 0.0
    %v495 = vmul.f32 %v449, 0.01
    %v496 = vmul.f32 %v454, 0.01
    %v497 = vmul.f32 %v459, 0.01
    %v498 = vmul.f32 %v464, 0.01
    %v499 = vmul.f32 %v469, 0.01
    %v500 = vmul.f32 %v474, 0.01
    %v501 = vmul.f32 %v479, 0.01
    %v502 = vmul.f32 %v484, 0.01
    %v503 = vsel %vm487, %v449, %v495
    %v504 = vsel %vm488, %v454, %v496
    %v505 = vsel %vm489, %v459, %v497
    %v506 = vsel %vm490, %v464, %v498
    %v507 = vsel %vm491, %v469, %v499
    %v508 = vsel %vm492, %v474, %v500
    %v509 = vsel %vm493, %v479, %v501
    %v510 = vsel %vm494, %v484, %v502
    %v511 = vld [vmem:[%s5] sm:$0x3]
    %v512 = vld [vmem:[%s6] sm:$0x3]
    %514 = vset.pattern.permute.xlu0 0
    %515 = vperm.xlu0 %514, %v512
    %v516 = vpop.permute.xlu0 %515
    %v519 = vsel %vm357, %v511, 0
    %521 = vmatprep.subr.mxu0 0.0
    %522 = vmatpush1.msra.mxu0 %v503
    %523 = vmatprep.subr.mxu0 0.0
    %524 = vmatpush1.msra.mxu0 %v504
    %525 = vmatprep.subr.mxu0 0.0
    %526 = vmatpush1.msra.mxu0 %v505
    %527 = vmatprep.subr.mxu0 0.0
    %528 = vmatpush1.msra.mxu0 %v506
    %529 = vmatprep.subr.mxu0 0.0
    %530 = vmatpush1.msra.mxu0 %v507
    %531 = vmatprep.subr.mxu0 0.0
    %532 = vmatpush1.msra.mxu0 %v508
    %533 = vmatprep.subr.mxu0 0.0
    %534 = vmatpush1.msra.mxu0 %v509
    %535 = vmatprep.subr.mxu0 0.0
    %536 = vmatpush1.msra.mxu0 %v510
    %537 = vmatprep.subr.mxu0 0.0
    %538 = vmatpush1.msra.mxu0 0.0
    %539 = vmatprep.subr.mxu0 0.0
    %540 = vmatpush1.msra.mxu0 0.0
    %541 = vmatprep.subr.mxu0 0.0
    %542 = vmatpush1.msra.mxu0 0.0
    %543 = vmatprep.subr.mxu0 0.0
    %544 = vmatpush1.msra.mxu0 0.0
    %545 = vmatprep.subr.mxu0 0.0
    %546 = vmatpush1.msra.mxu0 0.0
    %547 = vmatprep.subr.mxu0 0.0
    %548 = vmatpush1.msra.mxu0 0.0
    %549 = vmatprep.subr.mxu0 0.0
    %550 = vmatpush1.msra.mxu0 0.0
    %551 = vmatprep.subr.mxu0 0.0
    %552 = vmatpush1.msra.mxu0 0.0
    %553 = vmatprep.subr.mxu0 0.0
    %554 = vmatpush1.msra.mxu0 0.0
    %555 = vmatprep.subr.mxu0 0.0
    %556 = vmatpush1.msra.mxu0 0.0
    %557 = vmatprep.subr.mxu0 0.0
    %558 = vmatpush1.msra.mxu0 0.0
    %559 = vmatprep.subr.mxu0 0.0
    %560 = vmatpush1.msra.mxu0 0.0
    %561 = vmatprep.subr.mxu0 0.0
    %562 = vmatpush1.msra.mxu0 0.0
    %563 = vmatprep.subr.mxu0 0.0
    %564 = vmatpush1.msra.mxu0 0.0
    %565 = vmatprep.subr.mxu0 0.0
    %566 = vmatpush1.msra.mxu0 0.0
    %567 = vmatprep.subr.mxu0 0.0
    %568 = vmatpush1.msra.mxu0 0.0
    %569 = vmatprep.subr.mxu0 0.0
    %570 = vmatpush1.msra.mxu0 0.0
    %571 = vmatprep.subr.mxu0 0.0
    %572 = vmatpush1.msra.mxu0 0.0
    %573 = vmatprep.subr.mxu0 0.0
    %574 = vmatpush1.msra.mxu0 0.0
    %575 = vmatprep.subr.mxu0 0.0
    %576 = vmatpush1.msra.mxu0 0.0
    %577 = vmatprep.subr.mxu0 0.0
    %578 = vmatpush1.msra.mxu0 0.0
    %579 = vmatprep.subr.mxu0 0.0
    %580 = vmatpush1.msra.mxu0 0.0
    %581 = vmatprep.subr.mxu0 0.0
    %582 = vmatpush1.msra.mxu0 0.0
    %583 = vmatprep.subr.mxu0 0.0
    %584 = vmatpush1.msra.mxu0 0.0
    %585 = vmatprep.mubr.f32.mxu0 0.0
    %586 = vmatmul.mubr.f32.gmra.mrb[0].mxu0 %v519
    %v587 = vpop.f32.mrb[0].mxu0
    %v588 = vadd.f32 %v516, %v587
    %v589 = vpop.f32.mrb[0].mxu0
    %590 = vdwg.mxu0
    %591 = vst [vmem:[#allocation2] sm:$0x3] %v588
    // Predicated region
    $region30: #{feedforward_crit_2.1} parent=1 // pred_check
      _
    $region31: #{feedforward_crit_2.1} parent=1 // pred_check_branch
      %593 = sbr.rel (0) target = $region33
    $region32: #{feedforward_crit_2.1} parent=1 // pred_region
      %s595 = ssub.s32 32, 32
      %596 = vsyncadd [#allocation3], %s595
      %s598 = sshll.u32 [#allocation2], 4
      %s599 = int_to_ptr.vmem [resolvable:$true] %s598
      %601 = dma.vmem_to_hbm [thread:$0]  %s599, 32, %s7, [#allocation3]
    $region33: #{feedforward_crit_2.1} parent=1 // pred_fallthru
      _
    // Predicated region
    $region34: #{feedforward_crit_2.1} parent=1 // pred_check
      _
    $region35: #{feedforward_crit_2.1} parent=1 // pred_check_branch
      %603 = sbr.rel (0) target = $region37
    $region36: #{feedforward_crit_2.1} parent=1 // pred_region
      %604 = dma.done [#allocation3], 32
    $region37: #{feedforward_crit_2.1} parent=1 // pred_fallthru
      _
    %605 = vsyncpa [#allocation3], 1

</llo_original>
